<compile_context>
chip_gen: v6e
topology: v6e:2x2x1
jax: 0.10.0
libtpu: 0.0.40
codegen_flags: <defaults>
</compile_context>

<pallas_src>
import functools

import jax
import jax.numpy as jnp
from jax.experimental import pallas as pl
from jax.experimental.pallas import tpu as pltpu


HIDDEN = 30      # fc1 output features (fixed by the PyTorch module)
LANE = 128       # TPU lane width: hidden / nb_action padded up to this
SUBLANE = 8      # TPU sublane width


def _round_up(x, m):
    return ((x + m - 1) // m) * m


def _tensorcores_per_chip():
    """Best-effort count of TensorCores behind one Pallas device."""
    try:
        kind = jax.devices()[0].device_kind.lower()
    except Exception:  # pragma: no cover - defensive
        return 1
    # v4 / v5p (megacore) and v7x expose 2 TensorCores per device.
    return 2 if any(t in kind for t in ("v4", "v5p", "v7")) else 1


def _batch_tiling(B, *, max_tile=8192):
    """Pick (tile_rows, grid_steps): 1 step on 1-TC chips, balanced split on 2-TC."""
    n_tc = _tensorcores_per_chip()
    if n_tc > 1 and B >= 256:
        tb = _round_up(pl.cdiv(B, n_tc), SUBLANE)   # exactly n_tc balanced tiles
    else:
        tb = B                                      # single grid step
    if tb > max_tile:                               # VMEM safety cap (~4 MiB of h per tile)
        tb = max_tile
    if tb != B:
        tb = _round_up(tb, SUBLANE)                 # partial blocks need 8-aligned tiles
    return tb, pl.cdiv(B, tb)


def pack_params(w1, b1, w2, b2):
    """Pack (w1, b1, w2, b2) into ONE lane-dense f32 buffer (single DMA).

    Layout (rows x 128 lanes), k_pad = round_up(input_size + 2, 8):
      rows [0, input_size)       : W1, cols [0, HIDDEN)
      row  input_size            : b1, cols [0, HIDDEN)
      row  input_size + 1        : b2, cols [0, nb_action)
      rows [k_pad, k_pad + 128)  : W2 (HIDDEN x nb_action in top-left, rest 0)

    Padded hidden/action lanes are exactly zero, so they stay inert through
    the bias adds, ReLU and the second matmul.
    """
    input_size, hidden = w1.shape
    nb_action = w2.shape[1]
    assert hidden == HIDDEN and hidden <= LANE and nb_action <= LANE
    k_pad = _round_up(input_size + 2, SUBLANE)

    top = jnp.zeros((k_pad, LANE), jnp.float32)
    top = top.at[:input_size, :hidden].set(w1.astype(jnp.float32))
    top = top.at[input_size, :hidden].set(b1.astype(jnp.float32))       # fc1 bias row
    top = top.at[input_size + 1, :nb_action].set(b2.astype(jnp.float32))  # fc2 bias row

    bot = jnp.zeros((LANE, LANE), jnp.float32)
    bot = bot.at[:hidden, :nb_action].set(w2.astype(jnp.float32))

    packed = jnp.concatenate([top, bot], axis=0)     # (k_pad + 128, 128) ~ 68 KiB
    return packed, k_pad


def _mlp_kernel(x_ref, p_ref, out_ref, *, input_size, k_pad):
    # Static slices of the single packed-parameter block (free views / tiny copies).
    w1 = p_ref[0:input_size, :]                       # (input_size, 128)
    b1 = p_ref[input_size:input_size + 1, :]          # (1, 128)
    b2 = p_ref[input_size + 1:input_size + 2, :]      # (1, 128)
    w2 = p_ref[k_pad:k_pad + LANE, :]                 # (128, 128)

    x = x_ref[...]                                    # (tb, input_size), no padding
    h = jnp.dot(x, w1, preferred_element_type=jnp.float32) + b1   # fc1 + bias (VPU add)
    h = jnp.maximum(h, 0.0)                           # ReLU; padded lanes stay 0
    q = jnp.dot(h, w2, preferred_element_type=jnp.float32) + b2   # fc2 + bias
    # Store only the real action lanes -> small (B, nb_action) output, no wrapper slice.
    out_ref[...] = q[:, :out_ref.shape[1]].astype(out_ref.dtype)


def _pallas_forward(state, packed, k_pad, nb_action):
    B, input_size = state.shape
    tb, grid = _batch_tiling(B)
    n_rows = packed.shape[0]

    flops = 2 * B * (input_size * LANE + LANE * LANE)
    bytes_accessed = 4 * (B * input_size + n_rows * LANE + B * nb_action)

    return pl.pallas_call(
        functools.partial(_mlp_kernel, input_size=input_size, k_pad=k_pad),
        out_shape=jax.ShapeDtypeStruct((B, nb_action), jnp.float32),
        grid_spec=pltpu.PrefetchScalarGridSpec(
            num_scalar_prefetch=0,
            grid=(grid,),                                          # batch-only grid
            in_specs=[
                pl.BlockSpec((tb, input_size), lambda i: (i, 0)),  # raw state rows
                pl.BlockSpec((n_rows, LANE), lambda i: (0, 0)),    # weights VMEM-resident
            ],
            out_specs=pl.BlockSpec((tb, nb_action), lambda i: (i, 0)),
        ),
        compiler_params=pltpu.CompilerParams(
            dimension_semantics=("parallel",)),        # 2-TC chips split the batch
        cost_estimate=pl.CostEstimate(
            flops=flops, transcendentals=0, bytes_accessed=bytes_accessed),
    )(state.astype(jnp.float32), packed)


def network_forward(state, params, *, min_pallas_batch=64):
    """q_values = fc2(relu(fc1(state))) — matches Network.forward."""
    w1, b1, w2, b2, packed, k_pad = params
    B = state.shape[0]
    nb_action = w2.shape[1]
    if B < min_pallas_batch:
        # Online-inference path: a fused jnp expression beats any custom call here.
        x = state.astype(jnp.float32)
        return jnp.maximum(x @ w1 + b1, 0.0) @ w2 + b2
    return _pallas_forward(state, packed, k_pad, nb_action)


def init_params(key, input_size, nb_action, hidden=HIDDEN):
    """Init mimicking torch.nn.Linear default U(-1/sqrt(fan_in), +1/sqrt(fan_in))."""
    k1, k2, k3, k4 = jax.random.split(key, 4)
    bound1 = 1.0 / jnp.sqrt(jnp.float32(input_size))
    bound2 = 1.0 / jnp.sqrt(jnp.float32(hidden))
    w1 = jax.random.uniform(k1, (input_size, hidden), jnp.float32, -bound1, bound1)
    b1 = jax.random.uniform(k2, (hidden,), jnp.float32, -bound1, bound1)
    w2 = jax.random.uniform(k3, (hidden, nb_action), jnp.float32, -bound2, bound2)
    b2 = jax.random.uniform(k4, (nb_action,), jnp.float32, -bound2, bound2)
    return w1, b1, w2, b2


if __name__ == "__main__":
    # Shapes consistent with the self-driving-car module:
    # input_size=5 (3 sensors + orientation, -orientation), nb_action=3.
    input_size, nb_action = 5, 3

    key = jax.random.PRNGKey(0)
    k_p, k_small, k_big = jax.random.split(key, 3)
    w1, b1, w2, b2 = init_params(k_p, input_size, nb_action)
    packed, k_pad = pack_params(w1, b1, w2, b2)
    params = (w1, b1, w2, b2, packed, k_pad)

    def ref_fwd(x):
        return jnp.maximum(x @ w1 + b1, 0.0) @ w2 + b2

    # Small batch forced through the Pallas kernel (single full-array block, 1 step).
    state_small = jax.random.normal(k_small, (8, input_size), jnp.float32)
    q_small = network_forward(state_small, params, min_pallas_batch=1)
    jax.block_until_ready(q_small)
    assert q_small.shape == (8, nb_action)
    assert jnp.allclose(q_small, ref_fwd(state_small), atol=1e-4, rtol=1e-4)

    # Default gating: tiny batches take the plain fused jnp path.
    q_small_jnp = network_forward(state_small, params)
    assert jnp.allclose(q_small_jnp, ref_fwd(state_small), atol=1e-4, rtol=1e-4)

    # DQN replay batch: Pallas path (1 grid step on v5e/v6e, 2 balanced tiles on v7x).
    state_big = jax.random.normal(k_big, (1100, input_size), jnp.float32)
    q_big = network_forward(state_big, params)
    jax.block_until_ready(q_big)
    assert q_big.shape == (1100, nb_action)
    assert jnp.allclose(q_big, ref_fwd(state_big), atol=1e-4, rtol=1e-4)

    print("KERNEL_OK")
</pallas_src>

<mosaic_0001>
module attributes {stable_mosaic.version = 11 : i64} {
  func.func @_mlp_kernel(%arg0: i32, %arg1: memref<8x5xf32, #tpu.memory_space<vmem>>, %arg2: memref<136x128xf32, #tpu.memory_space<vmem>>, %arg3: memref<8x3xf32, #tpu.memory_space<vmem>>) attributes {dimension_semantics = [#tpu.dimension_semantics<parallel>], iteration_bounds = array<i64: 1>, scalar_prefetch = 0 : i64, scratch_operands = 0 : i64, tpu.core_type = #tpu.core_type<tc>, window_params = [{transform_indices = @transform_0, window_bounds = array<i64: 8, 5>}, {pipeline_mode = #tpu.pipeline_mode<synchronous>, transform_indices = @transform_1, window_bounds = array<i64: 136, 128>}, {transform_indices = @transform_2, window_bounds = array<i64: 8, 3>}]} {
    %c0 = arith.constant 0 : index
    %c0_0 = arith.constant 0 : index
    %0 = vector.load %arg2[%c0, %c0_0] : memref<136x128xf32, #tpu.memory_space<vmem>>, vector<5x128xf32>
    %c5 = arith.constant 5 : index
    %c0_1 = arith.constant 0 : index
    %1 = vector.load %arg2[%c5, %c0_1] : memref<136x128xf32, #tpu.memory_space<vmem>>, vector<1x128xf32>
    %c6 = arith.constant 6 : index
    %c0_2 = arith.constant 0 : index
    %2 = vector.load %arg2[%c6, %c0_2] : memref<136x128xf32, #tpu.memory_space<vmem>>, vector<1x128xf32>
    %c8 = arith.constant 8 : index
    %c0_3 = arith.constant 0 : index
    %3 = vector.load %arg2[%c8, %c0_3] : memref<136x128xf32, #tpu.memory_space<vmem>>, vector<128x128xf32>
    %c0_4 = arith.constant 0 : index
    %c0_5 = arith.constant 0 : index
    %4 = vector.load %arg1[%c0_4, %c0_5] : memref<8x5xf32, #tpu.memory_space<vmem>>, vector<8x5xf32>
    %cst = arith.constant dense<0.000000e+00> : vector<8x128xf32>
    %5 = tpu.matmul %4, %0, %cst {dimension_numbers = #tpu.dot_dimension_numbers<[1], [0], [0], [1], [0, 0, 1, 1], [], []>} : vector<8x5xf32>, vector<5x128xf32>, vector<8x128xf32> -> vector<8x128xf32>
    %6 = vector.broadcast %1 : vector<1x128xf32> to vector<8x128xf32>
    %7 = arith.addf %5, %6 : vector<8x128xf32>
    %cst_6 = arith.constant 0.000000e+00 : f32
    %8 = vector.broadcast %cst_6 : f32 to vector<8x128xf32>
    %9 = arith.maximumf %7, %8 : vector<8x128xf32>
    %cst_7 = arith.constant dense<0.000000e+00> : vector<8x128xf32>
    %10 = tpu.matmul %9, %3, %cst_7 {dimension_numbers = #tpu.dot_dimension_numbers<[1], [0], [0], [1], [0, 0, 1, 1], [], []>} : vector<8x128xf32>, vector<128x128xf32>, vector<8x128xf32> -> vector<8x128xf32>
    %11 = vector.broadcast %2 : vector<1x128xf32> to vector<8x128xf32>
    %12 = arith.addf %10, %11 : vector<8x128xf32>
    %13 = vector.extract_strided_slice %12 {offsets = [0, 0], sizes = [8, 3], strides = [1, 1]} : vector<8x128xf32> to vector<8x3xf32>
    %c0_8 = arith.constant 0 : index
    %c0_9 = arith.constant 0 : index
    %14 = vector.load %arg3[%c0_8, %c0_9] : memref<8x3xf32, #tpu.memory_space<vmem>>, vector<8x3xf32>
    tpu.vector_store %arg3[%c0_8, %c0_9], %13 {strides = array<i32>} : memref<8x3xf32, #tpu.memory_space<vmem>>, vector<8x3xf32>,
    return
  }
  func.func @transform_0(%arg0: i32) -> (i32, i32) {
    %c0_i32 = arith.constant 0 : i32
    %c0_i32_0 = arith.constant 0 : i32
    return %arg0, %c0_i32 : i32, i32
  }
  func.func @transform_1(%arg0: i32) -> (i32, i32) {
    %c0_i32 = arith.constant 0 : i32
    %c0_i32_0 = arith.constant 0 : i32
    %c0_i32_1 = arith.constant 0 : i32
    return %c0_i32, %c0_i32_0 : i32, i32
  }
  func.func @transform_2(%arg0: i32) -> (i32, i32) {
    %c0_i32 = arith.constant 0 : i32
    %c0_i32_0 = arith.constant 0 : i32
    return %arg0, %c0_i32 : i32, i32
  }
}

</mosaic_0001>

<llo_original>
// kernel: tpu_custom_call.1
$region0: #{tpu_custom_call.1}
  #allocation0 [shape = 'u32[]', space=smem, size = 0x4, offset = 0x4, fixed_abs, tag = 'smem constant byte address 0x4 - core index']
  #allocation1 [shape = 'u32[144,128]{1,0:T(1,128)}', space=vmem, size = 0x12000, scoped, tag = 'internal scratch']
  %s0 = inlined_call_operand.hbm [shape: f32[8,5], index: 0, kind: input, shape index: {}]
  %s1 = inlined_call_operand.hbm [shape: f32[136,128], index: 1, kind: input, shape index: {}]
  %s2 = inlined_call_operand.vmem [shape: f32[8,3], index: 2, kind: output, shape index: {}]
  %s3 = sld [smem:[#allocation0]]
  $region26: #{tpu_custom_call.1} parent=0
    _
  %s5 = ssub.s32 1, %s3
  %s6 = scalar_select 0, %s5, %s3
  $region1: #{tpu_custom_call.1} parent=0
    #allocation2 [shape = 'u8[4096]{0}', space=vmem, size = 0x1000, scoped, tag = 'input window, operand 0, single buffered']
    #allocation3 [shape = 's32[1]{0}', space=sflag, size = 0x4, scoped, tag = 'scoped memory for tpu_custom_call.1']
    #allocation4 [shape = 'u8[69632]{0}', space=vmem, size = 0x11000, scoped, tag = 'input window, operand 1, single buffered']
    #allocation5 [shape = 's32[1]{0}', space=sflag, size = 0x4, scoped, tag = 'scoped memory for tpu_custom_call.1']
    %7 = vsyncpa [#allocation3], 0
    %8 = vsyncpa [#allocation5], 0
    // Predicated region
    $region2: #{tpu_custom_call.1} parent=1 // pred_check
      _
    $region3: #{tpu_custom_call.1} parent=1 // pred_check_branch
      %10 = sbr.rel (0) target = $region5
    $region4: #{tpu_custom_call.1} parent=1 // pred_region
      %s12 = ssub.s32 128, 128
      %13 = vsyncadd [#allocation3], %s12
      %s15 = sshll.u32 [#allocation2], 4
      %s16 = int_to_ptr.vmem [resolvable:$true] %s15
      %18 = dma.hbm_to_vmem [thread:$0]  %s0, 128, %s16, [#allocation3]
    $region5: #{tpu_custom_call.1} parent=1 // pred_fallthru
      _
    // Predicated region
    $region6: #{tpu_custom_call.1} parent=1 // pred_check
      _
    $region7: #{tpu_custom_call.1} parent=1 // pred_check_branch
      %20 = sbr.rel (0) target = $region9
    $region8: #{tpu_custom_call.1} parent=1 // pred_region
      %s22 = ssub.s32 2176, 2176
      %23 = vsyncadd [#allocation5], %s22
      %s24 = sshll.u32 [#allocation4], 4
      %s25 = int_to_ptr.vmem [resolvable:$true] %s24
      %30 = dma.hbm_to_vmem [thread:$0]  %s1, 2176, %s25, [#allocation5], 128, 128, 8
    $region9: #{tpu_custom_call.1} parent=1 // pred_fallthru
      _
    // Predicated region
    $region10: #{tpu_custom_call.1} parent=1 // pred_check
      _
    $region11: #{tpu_custom_call.1} parent=1 // pred_check_branch
      %32 = sbr.rel (0) target = $region13
    $region12: #{tpu_custom_call.1} parent=1 // pred_region
      %33 = dma.done [#allocation3], 128
    $region13: #{tpu_custom_call.1} parent=1 // pred_fallthru
      _
    // Predicated region
    $region14: #{tpu_custom_call.1} parent=1 // pred_check
      _
    $region15: #{tpu_custom_call.1} parent=1 // pred_check_branch
      %35 = sbr.rel (0) target = $region17
    $region16: #{tpu_custom_call.1} parent=1 // pred_region
      %36 = dma.done [#allocation5], 2176
    $region17: #{tpu_custom_call.1} parent=1 // pred_fallthru
      _
    %v37 = vld [vmem:[#allocation4] sm:$0x1f]
    %v38 = vld [vmem:[#allocation4 + $0x5] sm:$0x1]
    %v39 = vld [vmem:[#allocation4 + $0x6] sm:$0x1]
    %v40 = vld [vmem:[#allocation4 + $0x8] sm:$0xff]
    %v41 = vld [vmem:[#allocation4 + $0x10] sm:$0xff]
    %v42 = vld [vmem:[#allocation4 + $0x18] sm:$0xff]
    %v43 = vld [vmem:[#allocation4 + $0x20] sm:$0xff]
    %v44 = vld [vmem:[#allocation4 + $0x28] sm:$0xff]
    %v45 = vld [vmem:[#allocation4 + $0x30] sm:$0xff]
    %v46 = vld [vmem:[#allocation4 + $0x38] sm:$0xff]
    %v47 = vld [vmem:[#allocation4 + $0x40] sm:$0xff]
    %v48 = vld [vmem:[#allocation4 + $0x48] sm:$0xff]
    %v49 = vld [vmem:[#allocation4 + $0x50] sm:$0xff]
    %v50 = vld [vmem:[#allocation4 + $0x58] sm:$0xff]
    %v51 = vld [vmem:[#allocation4 + $0x60] sm:$0xff]
    %v52 = vld [vmem:[#allocation4 + $0x68] sm:$0xff]
    %v53 = vld [vmem:[#allocation4 + $0x70] sm:$0xff]
    %v54 = vld [vmem:[#allocation4 + $0x78] sm:$0xff]
    %v55 = vld [vmem:[#allocation4 + $0x80] sm:$0xff]
    %v56 = vld [vmem:[#allocation2] sm:$0xff]
    %v57 = vlaneseq
    %v58 = vshrl.u32 %v57, 7
    %v59 = vsub.s32 0, %v58
    %v60 = vrot.slane %v38, %v59
    %vm61 = vcmask 39936
    %v63 = vsel %vm61, %v56, 0
    %vm65 = vcmask 1044480
    %v67 = vsel %vm65, %v37, 0
    %69 = vmatprep.subr.mxu0 0.0
    %70 = vmatpush1.msra.mxu0 0.0
    %71 = vmatprep.subr.mxu0 0.0
    %72 = vmatpush1.msra.mxu0 0.0
    %73 = vmatprep.subr.mxu0 0.0
    %74 = vmatpush1.msra.mxu0 0.0
    %75 = vmatprep.subr.mxu0 0.0
    %76 = vmatpush1.msra.mxu0 0.0
    %77 = vmatprep.subr.mxu0 0.0
    %78 = vmatpush1.msra.mxu0 0.0
    %79 = vmatprep.subr.mxu0 0.0
    %80 = vmatpush1.msra.mxu0 0.0
    %81 = vmatprep.subr.mxu0 0.0
    %82 = vmatpush1.msra.mxu0 0.0
    %83 = vmatprep.subr.mxu0 0.0
    %84 = vmatpush1.msra.mxu0 0.0
    %85 = vmatprep.subr.mxu0 0.0
    %86 = vmatpush1.msra.mxu0 0.0
    %87 = vmatprep.subr.mxu0 0.0
    %88 = vmatpush1.msra.mxu0 0.0
    %89 = vmatprep.subr.mxu0 0.0
    %90 = vmatpush1.msra.mxu0 0.0
    %91 = vmatprep.subr.mxu0 0.0
    %92 = vmatpush1.msra.mxu0 0.0
    %93 = vmatprep.subr.mxu0 0.0
    %94 = vmatpush1.msra.mxu0 0.0
    %95 = vmatprep.subr.mxu0 0.0
    %96 = vmatpush1.msra.mxu0 0.0
    %97 = vmatprep.subr.mxu0 0.0
    %98 = vmatpush1.msra.mxu0 0.0
    %99 = vmatprep.subr.mxu0 0.0
    %100 = vmatpush1.msra.mxu0 %v67
    %101 = vmatprep.subr.mxu0 0.0
    %102 = vmatpush2.msra.mxu0 0.0
    %103 = vmatprep.subr.mxu0 0.0
    %104 = vmatpush2.msra.mxu0 0.0
    %105 = vmatprep.subr.mxu0 0.0
    %106 = vmatpush2.msra.mxu0 0.0
    %107 = vmatprep.subr.mxu0 0.0
    %108 = vmatpush2.msra.mxu0 0.0
    %109 = vmatprep.subr.mxu0 0.0
    %110 = vmatpush2.msra.mxu0 0.0
    %111 = vmatprep.subr.mxu0 0.0
    %112 = vmatpush2.msra.mxu0 0.0
    %113 = vmatprep.subr.mxu0 0.0
    %114 = vmatpush2.msra.mxu0 0.0
    %115 = vmatprep.subr.mxu0 0.0
    %116 = vmatpush2.msra.mxu0 0.0
    %117 = vmatprep.subr.mxu0 0.0
    %118 = vmatpush2.msra.mxu0 0.0
    %119 = vmatprep.subr.mxu0 0.0
    %120 = vmatpush2.msra.mxu0 0.0
    %121 = vmatprep.subr.mxu0 0.0
    %122 = vmatpush2.msra.mxu0 0.0
    %123 = vmatprep.subr.mxu0 0.0
    %124 = vmatpush2.msra.mxu0 0.0
    %125 = vmatprep.subr.mxu0 0.0
    %126 = vmatpush2.msra.mxu0 0.0
    %127 = vmatprep.subr.mxu0 0.0
    %128 = vmatpush2.msra.mxu0 0.0
    %129 = vmatprep.subr.mxu0 0.0
    %130 = vmatpush2.msra.mxu0 0.0
    %131 = vmatprep.subr.mxu0 0.0
    %132 = vmatpush2.msra.mxu0 0.0
    %133 = vmatprep.mubr.f32.mxu0 0.0
    %134 = vmatmul.mubr.f32.gmra.mxu0 %v63
    %v135 = vpop.f32.mrf.mxu0
    %v136 = vadd.f32 %v60, %v135
    %v137 = vpop.f32.mrf.mxu0
    %138 = vdwg.mxu0
    %v139 = vmax.f32 %v136, 0.0
    %v140 = vlaneseq
    %v141 = vshrl.u32 %v140, 7
    %v142 = vsub.s32 0, %v141
    %v143 = vrot.slane %v39, %v142
    %144 = vmatprep.subr.mxu0 0.0
    %145 = vmatpush1.msra.mxu0 %v55
    %146 = vmatprep.subr.mxu0 0.0
    %147 = vmatpush1.msra.mxu0 %v54
    %148 = vmatprep.subr.mxu0 0.0
    %149 = vmatpush1.msra.mxu0 %v53
    %150 = vmatprep.subr.mxu0 0.0
    %151 = vmatpush1.msra.mxu0 %v52
    %152 = vmatprep.subr.mxu0 0.0
    %153 = vmatpush1.msra.mxu0 %v51
    %154 = vmatprep.subr.mxu0 0.0
    %155 = vmatpush1.msra.mxu0 %v50
    %156 = vmatprep.subr.mxu0 0.0
    %157 = vmatpush1.msra.mxu0 %v49
    %158 = vmatprep.subr.mxu0 0.0
    %159 = vmatpush1.msra.mxu0 %v48
    %160 = vmatprep.subr.mxu0 0.0
    %161 = vmatpush1.msra.mxu0 %v47
    %162 = vmatprep.subr.mxu0 0.0
    %163 = vmatpush1.msra.mxu0 %v46
    %164 = vmatprep.subr.mxu0 0.0
    %165 = vmatpush1.msra.mxu0 %v45
    %166 = vmatprep.subr.mxu0 0.0
    %167 = vmatpush1.msra.mxu0 %v44
    %168 = vmatprep.subr.mxu0 0.0
    %169 = vmatpush1.msra.mxu0 %v43
    %170 = vmatprep.subr.mxu0 0.0
    %171 = vmatpush1.msra.mxu0 %v42
    %172 = vmatprep.subr.mxu0 0.0
    %173 = vmatpush1.msra.mxu0 %v41
    %174 = vmatprep.subr.mxu0 0.0
    %175 = vmatpush1.msra.mxu0 %v40
    %176 = vmatprep.subr.mxu0 0.0
    %177 = vmatpush2.msra.mxu0 0.0
    %178 = vmatprep.subr.mxu0 0.0
    %179 = vmatpush2.msra.mxu0 0.0
    %180 = vmatprep.subr.mxu0 0.0
    %181 = vmatpush2.msra.mxu0 0.0
    %182 = vmatprep.subr.mxu0 0.0
    %183 = vmatpush2.msra.mxu0 0.0
    %184 = vmatprep.subr.mxu0 0.0
    %185 = vmatpush2.msra.mxu0 0.0
    %186 = vmatprep.subr.mxu0 0.0
    %187 = vmatpush2.msra.mxu0 0.0
    %188 = vmatprep.subr.mxu0 0.0
    %189 = vmatpush2.msra.mxu0 0.0
    %190 = vmatprep.subr.mxu0 0.0
    %191 = vmatpush2.msra.mxu0 0.0
    %192 = vmatprep.subr.mxu0 0.0
    %193 = vmatpush2.msra.mxu0 0.0
    %194 = vmatprep.subr.mxu0 0.0
    %195 = vmatpush2.msra.mxu0 0.0
    %196 = vmatprep.subr.mxu0 0.0
    %197 = vmatpush2.msra.mxu0 0.0
    %198 = vmatprep.subr.mxu0 0.0
    %199 = vmatpush2.msra.mxu0 0.0
    %200 = vmatprep.subr.mxu0 0.0
    %201 = vmatpush2.msra.mxu0 0.0
    %202 = vmatprep.subr.mxu0 0.0
    %203 = vmatpush2.msra.mxu0 0.0
    %204 = vmatprep.subr.mxu0 0.0
    %205 = vmatpush2.msra.mxu0 0.0
    %206 = vmatprep.subr.mxu0 0.0
    %207 = vmatpush2.msra.mxu0 0.0
    %208 = vmatprep.mubr.f32.mxu0 0.0
    %209 = vmatmul.mubr.f32.gmra.mxu0 %v139
    %v210 = vpop.f32.mrf.mxu0
    %v211 = vadd.f32 %v143, %v210
    %v212 = vpop.f32.mrf.mxu0
    %213 = vdwg.mxu0
    %vm214 = vcmask 23552
    %215 = vst.msk [vmem:[%s2] sm:$0xff] %vm214, %v211
    // Predicated region
    $region18: #{tpu_custom_call.1} parent=1 // pred_check
      _
    $region19: #{tpu_custom_call.1} parent=1 // pred_check_branch
      %217 = sbr.rel (0) target = $region21
    $region20: #{tpu_custom_call.1} parent=1 // pred_region
      _
    $region21: #{tpu_custom_call.1} parent=1 // pred_fallthru
      _
    // Predicated region
    $region22: #{tpu_custom_call.1} parent=1 // pred_check
      _
    $region23: #{tpu_custom_call.1} parent=1 // pred_check_branch
      %219 = sbr.rel (0) target = $region25
    $region24: #{tpu_custom_call.1} parent=1 // pred_region
      _
    $region25: #{tpu_custom_call.1} parent=1 // pred_fallthru
      _
    %220 = vsyncpa [#allocation3], 1
    %221 = vsyncpa [#allocation5], 1

</llo_original>
